<compile_context>
chip_gen: v6e
topology: v6e:2x2x1
jax: 0.10.0
libtpu: 0.0.40
codegen_flags: <defaults>
</compile_context>

<pallas_src>
import jax
import jax.numpy as jnp
from jax.experimental import pallas as pl
from jax.experimental.pallas import tpu as pltpu


def _round_up(v, m):
    return ((v + m - 1) // m) * m


# ---------------------------------------------------------------------------
# Parameter init (mimics nn.Linear default U(-1/sqrt(fan_in), +)) and packing
# ---------------------------------------------------------------------------
def init_critic_params(key, n_in, n_hidden):
    ks = jax.random.split(key, 6)

    def linear(kw, kb, fan_in, fan_out):
        bound = 1.0 / jnp.sqrt(jnp.float32(fan_in))
        w = jax.random.uniform(kw, (fan_in, fan_out), jnp.float32,
                               minval=-bound, maxval=bound)
        b = jax.random.uniform(kb, (1, fan_out), jnp.float32,
                               minval=-bound, maxval=bound)
        return w, b

    w1, b1 = linear(ks[0], ks[1], n_in, n_hidden)
    w2, b2 = linear(ks[2], ks[3], n_hidden, n_hidden)
    w3, b3 = linear(ks[4], ks[5], n_hidden, 1)
    return (w1, b1, w2, b2, w3, b3)


def pack_critic_params(params, n_x, n_u):
    """Pack (w1,b1,w2,b2,w3,b3) into one lane-padded f32 slab.

    Done ONCE at init so the steady-state forward is exactly one pallas_call
    with a single weight stream.  Every segment starts on an 8-row boundary
    and the lane dim is padded to a multiple of 128 (zero-padded columns are
    mathematically inert: relu(0+0)=0 and zero weight rows/lanes contribute 0;
    note this relies on zero-preserving activations).
    """
    w1, b1, w2, b2, w3, b3 = params
    n_in, h = w1.shape
    assert n_in == n_x + n_u
    hp = _round_up(h, 128)
    a8 = lambda v: _round_up(v, 8)

    o_w1x = 0
    o_w1u = o_w1x + a8(n_x)
    o_b1 = o_w1u + a8(n_u)
    o_w2 = o_b1 + 8
    o_b2 = o_w2 + hp
    o_w3 = o_b2 + 8
    o_b3 = o_w3 + 8
    rows = o_b3 + 8

    slab = jnp.zeros((rows, hp), jnp.float32)
    slab = slab.at[o_w1x:o_w1x + n_x, :h].set(w1[:n_x].astype(jnp.float32))
    slab = slab.at[o_w1u:o_w1u + n_u, :h].set(w1[n_x:].astype(jnp.float32))
    slab = slab.at[o_b1, :h].set(b1.reshape(-1).astype(jnp.float32))
    slab = slab.at[o_w2:o_w2 + h, :h].set(w2.astype(jnp.float32))
    slab = slab.at[o_b2, :h].set(b2.reshape(-1).astype(jnp.float32))
    slab = slab.at[o_w3, :h].set(w3.reshape(-1).astype(jnp.float32))
    slab = slab.at[o_b3, 0].set(b3.reshape(())[()].astype(jnp.float32))

    offs = (o_w1x, o_w1u, o_b1, o_w2, o_b2, o_w3, o_b3)
    return slab, offs, hp


# ---------------------------------------------------------------------------
# Kernel
# ---------------------------------------------------------------------------
def _make_kernel(n_x, n_u, hp, offs):
    o_w1x, o_w1u, o_b1, o_w2, o_b2, o_w3, o_b3 = offs

    def kernel(x_ref, u_ref, w_ref, o_ref):
        # In-kernel casts ride free VPU slots; no wrapper-side HBM copies.
        x = x_ref[...].astype(jnp.float32)                    # [TB, n_x]
        u = u_ref[...].astype(jnp.float32)                    # [TB, n_u]
        # Layer 1 (concat fused by splitting W1):
        h1 = jnp.dot(x, w_ref[o_w1x:o_w1x + n_x, :],
                     preferred_element_type=jnp.float32)
        h1 = h1 + jnp.dot(u, w_ref[o_w1u:o_w1u + n_u, :],
                          preferred_element_type=jnp.float32)
        h1 = jnp.maximum(h1 + w_ref[o_b1:o_b1 + 1, :], 0.0)   # [TB, Hp]
        # Layer 2:
        h2 = jnp.dot(h1, w_ref[o_w2:o_w2 + hp, :],
                     preferred_element_type=jnp.float32)
        h2 = jnp.maximum(h2 + w_ref[o_b2:o_b2 + 1, :], 0.0)   # [TB, Hp]
        # Layer 3: contract Hp of w3 with Hp of h2 -> lane-dense [1, TB] row
        # (no [TB, 1] column store; output stays 128-lane dense).
        w3_row = w_ref[o_w3:o_w3 + 1, :]                      # [1, Hp]
        q_t = jax.lax.dot_general(w3_row, h2, (((1,), (1,)), ((), ())),
                                  preferred_element_type=jnp.float32)
        o_ref[...] = q_t + w_ref[o_b3:o_b3 + 1, 0:1]          # [1, TB]

    return kernel


# ---------------------------------------------------------------------------
# Forward wrapper
# ---------------------------------------------------------------------------
def _choose_tiling(B, block_b):
    """Pick (nb, tb, B_pad) so that tb is 8-aligned, and a multiple of 128
    whenever there is more than one grid step (lane-dense output blocks)."""
    assert block_b >= 128 and block_b % 128 == 0
    nb = max(1, pl.cdiv(B, block_b))
    if nb == 1 and B >= 256:
        nb = 2            # v7x: keep >= 2 parallel steps to feed both cores
    if nb == 1:
        tb = _round_up(B, 8)                   # single block == padded batch
    else:
        tb = _round_up(pl.cdiv(B, nb), 128)    # lane-dense multi-step blocks
    return nb, tb, nb * tb


def critic_net_forward(x, u, slab, offs, hp, *, block_b=512):
    """x: [B, n_x], u: [B, n_u], slab: packed params  ->  q: [B, 1] f32."""
    B, n_x = x.shape
    _, n_u = u.shape
    rows = slab.shape[0]

    nb, tb, b_pad = _choose_tiling(B, block_b)
    if b_pad != B:
        # Zero-pad the ragged tail (cheap; padded rows are sliced off below).
        x = jnp.pad(x, ((0, b_pad - B), (0, 0)))
        u = jnp.pad(u, ((0, b_pad - B), (0, 0)))

    # Conservative VMEM cap derived from the tile (tiles are bounded, so this
    # stays far below v7x's 64 MiB physical VMEM).
    est = 4 * (2 * tb * (n_x + n_u) + 2 * rows * hp + 2 * tb + 6 * tb * hp)
    vmem_limit = int(min(max(2 * est, 16 << 20), 32 << 20))

    kernel = _make_kernel(n_x, n_u, hp, offs)

    q_row = pl.pallas_call(
        kernel,
        out_shape=jax.ShapeDtypeStruct((1, b_pad), jnp.float32),
        grid=(nb,),
        in_specs=[
            pl.BlockSpec((tb, n_x), lambda i: (i, 0)),     # x  (tiled over B)
            pl.BlockSpec((tb, n_u), lambda i: (i, 0)),     # u  (tiled over B)
            pl.BlockSpec((rows, hp), lambda i: (0, 0)),    # weights: resident
        ],
        out_specs=pl.BlockSpec((1, tb), lambda i: (0, i)),  # lane-dense out
        compiler_params=pltpu.CompilerParams(
            dimension_semantics=("parallel",),
            vmem_limit_bytes=vmem_limit),
    )(x, u, slab)

    return q_row[0, :B].reshape(B, 1)


# ---------------------------------------------------------------------------
# Pure-JAX reference of the PyTorch forward
# ---------------------------------------------------------------------------
def reference_forward(x, u, params):
    w1, b1, w2, b2, w3, b3 = params
    f = jnp.concatenate([x, u], axis=-1)
    h1 = jnp.maximum(f @ w1 + b1, 0.0)
    h2 = jnp.maximum(h1 @ w2 + b2, 0.0)
    return h2 @ w3 + b3


if __name__ == "__main__":
    key = jax.random.PRNGKey(0)

    # --- small test: CriticNet(n_x=(4,), n_u=(2,), n_hidden=32), batch 8 ----
    B, n_x, n_u, n_hidden = 8, 4, 2, 32
    kx, ku, kp, k2 = jax.random.split(key, 4)
    x = jax.random.normal(kx, (B, n_x), jnp.float32)
    u = jax.random.normal(ku, (B, n_u), jnp.float32)
    params = init_critic_params(kp, n_x + n_u, n_hidden)
    slab, offs, hp = pack_critic_params(params, n_x, n_u)

    q = jax.block_until_ready(critic_net_forward(x, u, slab, offs, hp))
    q_ref = reference_forward(x, u, params)
    assert q.shape == (B, 1)
    assert jnp.allclose(q, q_ref, atol=1e-5, rtol=1e-5)

    # --- tiled / ragged-tail path: default hidden=256, non-divisible B ------
    B2, n_x2, n_u2, n_h2 = 600, 4, 2, 256
    k2x, k2u, k2p = jax.random.split(k2, 3)
    x2 = jax.random.normal(k2x, (B2, n_x2), jnp.float32)
    u2 = jax.random.normal(k2u, (B2, n_u2), jnp.float32)
    params2 = init_critic_params(k2p, n_x2 + n_u2, n_h2)
    slab2, offs2, hp2 = pack_critic_params(params2, n_x2, n_u2)

    q2 = jax.block_until_ready(critic_net_forward(x2, u2, slab2, offs2, hp2))
    q2_ref = reference_forward(x2, u2, params2)
    assert q2.shape == (B2, 1)
    assert jnp.allclose(q2, q2_ref, atol=1e-4, rtol=1e-4)

    print("KERNEL_OK")
</pallas_src>

<mosaic_0001>
module attributes {stable_mosaic.version = 11 : i64} {
  func.func @kernel(%arg0: i32, %arg1: memref<8x4xf32, #tpu.memory_space<vmem>>, %arg2: memref<8x2xf32, #tpu.memory_space<vmem>>, %arg3: memref<176x128xf32, #tpu.memory_space<vmem>>, %arg4: memref<1x8xf32, #tpu.memory_space<vmem>>) attributes {dimension_semantics = [#tpu.dimension_semantics<parallel>], iteration_bounds = array<i64: 1>, scalar_prefetch = 0 : i64, scratch_operands = 0 : i64, tpu.core_type = #tpu.core_type<tc>, window_params = [{transform_indices = @transform_0, window_bounds = array<i64: 8, 4>}, {transform_indices = @transform_1, window_bounds = array<i64: 8, 2>}, {pipeline_mode = #tpu.pipeline_mode<synchronous>, transform_indices = @transform_2, window_bounds = array<i64: 176, 128>}, {transform_indices = @transform_3, window_bounds = array<i64: 1, 8>}]} {
    %c0 = arith.constant 0 : index
    %c0_0 = arith.constant 0 : index
    %0 = vector.load %arg1[%c0, %c0_0] : memref<8x4xf32, #tpu.memory_space<vmem>>, vector<8x4xf32>
    %c0_1 = arith.constant 0 : index
    %c0_2 = arith.constant 0 : index
    %1 = vector.load %arg2[%c0_1, %c0_2] : memref<8x2xf32, #tpu.memory_space<vmem>>, vector<8x2xf32>
    %c0_3 = arith.constant 0 : index
    %c0_4 = arith.constant 0 : index
    %2 = vector.load %arg3[%c0_3, %c0_4] : memref<176x128xf32, #tpu.memory_space<vmem>>, vector<4x128xf32>
    %cst = arith.constant dense<0.000000e+00> : vector<8x128xf32>
    %3 = tpu.matmul %0, %2, %cst {dimension_numbers = #tpu.dot_dimension_numbers<[1], [0], [0], [1], [0, 0, 1, 1], [], []>} : vector<8x4xf32>, vector<4x128xf32>, vector<8x128xf32> -> vector<8x128xf32>
    %c8 = arith.constant 8 : index
    %c0_5 = arith.constant 0 : index
    %4 = vector.load %arg3[%c8, %c0_5] : memref<176x128xf32, #tpu.memory_space<vmem>>, vector<2x128xf32>
    %cst_6 = arith.constant dense<0.000000e+00> : vector<8x128xf32>
    %5 = tpu.matmul %1, %4, %cst_6 {dimension_numbers = #tpu.dot_dimension_numbers<[1], [0], [0], [1], [0, 0, 1, 1], [], []>} : vector<8x2xf32>, vector<2x128xf32>, vector<8x128xf32> -> vector<8x128xf32>
    %6 = arith.addf %3, %5 : vector<8x128xf32>
    %c16 = arith.constant 16 : index
    %c0_7 = arith.constant 0 : index
    %7 = vector.load %arg3[%c16, %c0_7] : memref<176x128xf32, #tpu.memory_space<vmem>>, vector<1x128xf32>
    %8 = vector.broadcast %7 : vector<1x128xf32> to vector<8x128xf32>
    %9 = arith.addf %6, %8 : vector<8x128xf32>
    %cst_8 = arith.constant 0.000000e+00 : f32
    %10 = vector.broadcast %cst_8 : f32 to vector<8x128xf32>
    %11 = arith.maximumf %9, %10 : vector<8x128xf32>
    %c24 = arith.constant 24 : index
    %c0_9 = arith.constant 0 : index
    %12 = vector.load %arg3[%c24, %c0_9] : memref<176x128xf32, #tpu.memory_space<vmem>>, vector<128x128xf32>
    %cst_10 = arith.constant dense<0.000000e+00> : vector<8x128xf32>
    %13 = tpu.matmul %11, %12, %cst_10 {dimension_numbers = #tpu.dot_dimension_numbers<[1], [0], [0], [1], [0, 0, 1, 1], [], []>} : vector<8x128xf32>, vector<128x128xf32>, vector<8x128xf32> -> vector<8x128xf32>
    %c152 = arith.constant 152 : index
    %c0_11 = arith.constant 0 : index
    %14 = vector.load %arg3[%c152, %c0_11] : memref<176x128xf32, #tpu.memory_space<vmem>>, vector<1x128xf32>
    %15 = vector.broadcast %14 : vector<1x128xf32> to vector<8x128xf32>
    %16 = arith.addf %13, %15 : vector<8x128xf32>
    %cst_12 = arith.constant 0.000000e+00 : f32
    %17 = vector.broadcast %cst_12 : f32 to vector<8x128xf32>
    %18 = arith.maximumf %16, %17 : vector<8x128xf32>
    %c160 = arith.constant 160 : index
    %c0_13 = arith.constant 0 : index
    %19 = vector.load %arg3[%c160, %c0_13] : memref<176x128xf32, #tpu.memory_space<vmem>>, vector<1x128xf32>
    %cst_14 = arith.constant dense<0.000000e+00> : vector<1x8xf32>
    %20 = tpu.matmul %19, %18, %cst_14 {dimension_numbers = #tpu.dot_dimension_numbers<[1], [1], [0], [0], [0, 0, 1, 0], [], []>} : vector<1x128xf32>, vector<8x128xf32>, vector<1x8xf32> -> vector<1x8xf32>
    %c168 = arith.constant 168 : index
    %c0_15 = arith.constant 0 : index
    %21 = vector.load %arg3[%c168, %c0_15] : memref<176x128xf32, #tpu.memory_space<vmem>>, vector<1x1xf32>
    %22 = vector.broadcast %21 : vector<1x1xf32> to vector<1x8xf32>
    %23 = arith.addf %20, %22 : vector<1x8xf32>
    %c0_16 = arith.constant 0 : index
    %c0_17 = arith.constant 0 : index
    %24 = vector.load %arg4[%c0_16, %c0_17] : memref<1x8xf32, #tpu.memory_space<vmem>>, vector<1x8xf32>
    tpu.vector_store %arg4[%c0_16, %c0_17], %23 {strides = array<i32>} : memref<1x8xf32, #tpu.memory_space<vmem>>, vector<1x8xf32>,
    return
  }
  func.func @transform_0(%arg0: i32) -> (i32, i32) {
    %c0_i32 = arith.constant 0 : i32
    %c0_i32_0 = arith.constant 0 : i32
    return %arg0, %c0_i32 : i32, i32
  }
  func.func @transform_1(%arg0: i32) -> (i32, i32) {
    %c0_i32 = arith.constant 0 : i32
    %c0_i32_0 = arith.constant 0 : i32
    return %arg0, %c0_i32 : i32, i32
  }
  func.func @transform_2(%arg0: i32) -> (i32, i32) {
    %c0_i32 = arith.constant 0 : i32
    %c0_i32_0 = arith.constant 0 : i32
    %c0_i32_1 = arith.constant 0 : i32
    return %c0_i32, %c0_i32_0 : i32, i32
  }
  func.func @transform_3(%arg0: i32) -> (i32, i32) {
    %c0_i32 = arith.constant 0 : i32
    %c0_i32_0 = arith.constant 0 : i32
    return %c0_i32, %arg0 : i32, i32
  }
}

</mosaic_0001>

<llo_original>
// kernel: tpu_custom_call.1
$region0: #{tpu_custom_call.1}
  #allocation0 [shape = 'u32[]', space=smem, size = 0x4, offset = 0x4, fixed_abs, tag = 'smem constant byte address 0x4 - core index']
  #allocation1 [shape = 'u32[144,128]{1,0:T(1,128)}', space=vmem, size = 0x12000, scoped, tag = 'internal scratch']
  %s0 = inlined_call_operand.vmem [shape: f32[8,4], index: 0, kind: input, shape index: {}]
  %s1 = inlined_call_operand.vmem [shape: f32[8,2], index: 1, kind: input, shape index: {}]
  %s2 = inlined_call_operand.hbm [shape: f32[176,128], index: 2, kind: input, shape index: {}]
  %s3 = inlined_call_operand.hbm [shape: f32[1,8], index: 3, kind: output, shape index: {}]
  %s4 = sld [smem:[#allocation0]]
  $region26: #{tpu_custom_call.1} parent=0
    _
  %s6 = ssub.s32 1, %s4
  %s7 = scalar_select 0, %s6, %s4
  $region1: #{tpu_custom_call.1} parent=0
    #allocation2 [shape = 'u8[90112]{0}', space=vmem, size = 0x16000, scoped, tag = 'input window, operand 2, single buffered']
    #allocation3 [shape = 's32[1]{0}', space=sflag, size = 0x4, scoped, tag = 'scoped memory for tpu_custom_call.1']
    #allocation4 [shape = 's32[1]{0}', space=sflag, size = 0x4, scoped, tag = 'scoped memory for tpu_custom_call.1']
    #allocation5 [shape = 'u8[512]{0}', space=vmem, size = 0x400, scoped, tag = 'output window, operand 0, single buffered']
    %8 = vsyncpa [#allocation3], 0
    %9 = vsyncpa [#allocation4], 0
    // Predicated region
    $region2: #{tpu_custom_call.1} parent=1 // pred_check
      _
    $region3: #{tpu_custom_call.1} parent=1 // pred_check_branch
      %11 = sbr.rel (0) target = $region5
    $region4: #{tpu_custom_call.1} parent=1 // pred_region
      _
    $region5: #{tpu_custom_call.1} parent=1 // pred_fallthru
      _
    // Predicated region
    $region6: #{tpu_custom_call.1} parent=1 // pred_check
      _
    $region7: #{tpu_custom_call.1} parent=1 // pred_check_branch
      %13 = sbr.rel (0) target = $region9
    $region8: #{tpu_custom_call.1} parent=1 // pred_region
      _
    $region9: #{tpu_custom_call.1} parent=1 // pred_fallthru
      _
    // Predicated region
    $region10: #{tpu_custom_call.1} parent=1 // pred_check
      _
    $region11: #{tpu_custom_call.1} parent=1 // pred_check_branch
      %15 = sbr.rel (0) target = $region13
    $region12: #{tpu_custom_call.1} parent=1 // pred_region
      %s17 = ssub.s32 2816, 2816
      %18 = vsyncadd [#allocation3], %s17
      %s19 = sshll.u32 [#allocation2], 4
      %s20 = int_to_ptr.vmem [resolvable:$true] %s19
      %25 = dma.hbm_to_vmem [thread:$0]  %s2, 2816, %s20, [#allocation3], 128, 128, 8
    $region13: #{tpu_custom_call.1} parent=1 // pred_fallthru
      _
    // Predicated region
    $region14: #{tpu_custom_call.1} parent=1 // pred_check
      _
    $region15: #{tpu_custom_call.1} parent=1 // pred_check_branch
      %27 = sbr.rel (0) target = $region17
    $region16: #{tpu_custom_call.1} parent=1 // pred_region
      %28 = dma.done [#allocation3], 2816
    $region17: #{tpu_custom_call.1} parent=1 // pred_fallthru
      _
    %v29 = vld [vmem:[%s0] sm:$0xff]
    %v30 = vld [vmem:[%s1] sm:$0xff]
    %v31 = vld [vmem:[#allocation2] sm:$0xf]
    %v32 = vld [vmem:[#allocation2 + $0x8] sm:$0x3]
    %vm33 = vcmask 15360
    %v35 = vsel %vm33, %v30, 0
    %vm37 = vcmask 1041408
    %v39 = vsel %vm37, %v32, 0
    %41 = vmatprep.subr.mxu0 0.0
    %42 = vmatpush1.msra.mxu0 0.0
    %43 = vmatprep.subr.mxu0 0.0
    %44 = vmatpush1.msra.mxu0 0.0
    %45 = vmatprep.subr.mxu0 0.0
    %46 = vmatpush1.msra.mxu0 0.0
    %47 = vmatprep.subr.mxu0 0.0
    %48 = vmatpush1.msra.mxu0 0.0
    %49 = vmatprep.subr.mxu0 0.0
    %50 = vmatpush1.msra.mxu0 0.0
    %51 = vmatprep.subr.mxu0 0.0
    %52 = vmatpush1.msra.mxu0 0.0
    %53 = vmatprep.subr.mxu0 0.0
    %54 = vmatpush1.msra.mxu0 0.0
    %55 = vmatprep.subr.mxu0 0.0
    %56 = vmatpush1.msra.mxu0 0.0
    %57 = vmatprep.subr.mxu0 0.0
    %58 = vmatpush1.msra.mxu0 0.0
    %59 = vmatprep.subr.mxu0 0.0
    %60 = vmatpush1.msra.mxu0 0.0
    %61 = vmatprep.subr.mxu0 0.0
    %62 = vmatpush1.msra.mxu0 0.0
    %63 = vmatprep.subr.mxu0 0.0
    %64 = vmatpush1.msra.mxu0 0.0
    %65 = vmatprep.subr.mxu0 0.0
    %66 = vmatpush1.msra.mxu0 0.0
    %67 = vmatprep.subr.mxu0 0.0
    %68 = vmatpush1.msra.mxu0 0.0
    %69 = vmatprep.subr.mxu0 0.0
    %70 = vmatpush1.msra.mxu0 0.0
    %71 = vmatprep.subr.mxu0 0.0
    %72 = vmatpush1.msra.mxu0 %v39
    %73 = vmatprep.subr.mxu0 0.0
    %74 = vmatpush2.msra.mxu0 0.0
    %75 = vmatprep.subr.mxu0 0.0
    %76 = vmatpush2.msra.mxu0 0.0
    %77 = vmatprep.subr.mxu0 0.0
    %78 = vmatpush2.msra.mxu0 0.0
    %79 = vmatprep.subr.mxu0 0.0
    %80 = vmatpush2.msra.mxu0 0.0
    %81 = vmatprep.subr.mxu0 0.0
    %82 = vmatpush2.msra.mxu0 0.0
    %83 = vmatprep.subr.mxu0 0.0
    %84 = vmatpush2.msra.mxu0 0.0
    %85 = vmatprep.subr.mxu0 0.0
    %86 = vmatpush2.msra.mxu0 0.0
    %87 = vmatprep.subr.mxu0 0.0
    %88 = vmatpush2.msra.mxu0 0.0
    %89 = vmatprep.subr.mxu0 0.0
    %90 = vmatpush2.msra.mxu0 0.0
    %91 = vmatprep.subr.mxu0 0.0
    %92 = vmatpush2.msra.mxu0 0.0
    %93 = vmatprep.subr.mxu0 0.0
    %94 = vmatpush2.msra.mxu0 0.0
    %95 = vmatprep.subr.mxu0 0.0
    %96 = vmatpush2.msra.mxu0 0.0
    %97 = vmatprep.subr.mxu0 0.0
    %98 = vmatpush2.msra.mxu0 0.0
    %99 = vmatprep.subr.mxu0 0.0
    %100 = vmatpush2.msra.mxu0 0.0
    %101 = vmatprep.subr.mxu0 0.0
    %102 = vmatpush2.msra.mxu0 0.0
    %103 = vmatprep.subr.mxu0 0.0
    %104 = vmatpush2.msra.mxu0 0.0
    %105 = vmatprep.mubr.f32.mxu0 0.0
    %106 = vmatmul.mubr.f32.gmra.mxu0 %v35
    %v107 = vpop.f32.mrf.mxu0
    %v108 = vadd.f32 0.0, %v107
    %v109 = vpop.f32.mrf.mxu0
    %110 = vdwg.mxu0
    %vm111 = vcmask 31744
    %v113 = vsel %vm111, %v29, 0
    %vm115 = vcmask 1043456
    %v117 = vsel %vm115, %v31, 0
    %119 = vmatprep.subr.mxu0 0.0
    %120 = vmatpush1.msra.mxu0 0.0
    %121 = vmatprep.subr.mxu0 0.0
    %122 = vmatpush1.msra.mxu0 0.0
    %123 = vmatprep.subr.mxu0 0.0
    %124 = vmatpush1.msra.mxu0 0.0
    %125 = vmatprep.subr.mxu0 0.0
    %126 = vmatpush1.msra.mxu0 0.0
    %127 = vmatprep.subr.mxu0 0.0
    %128 = vmatpush1.msra.mxu0 0.0
    %129 = vmatprep.subr.mxu0 0.0
    %130 = vmatpush1.msra.mxu0 0.0
    %131 = vmatprep.subr.mxu0 0.0
    %132 = vmatpush1.msra.mxu0 0.0
    %133 = vmatprep.subr.mxu0 0.0
    %134 = vmatpush1.msra.mxu0 0.0
    %135 = vmatprep.subr.mxu0 0.0
    %136 = vmatpush1.msra.mxu0 0.0
    %137 = vmatprep.subr.mxu0 0.0
    %138 = vmatpush1.msra.mxu0 0.0
    %139 = vmatprep.subr.mxu0 0.0
    %140 = vmatpush1.msra.mxu0 0.0
    %141 = vmatprep.subr.mxu0 0.0
    %142 = vmatpush1.msra.mxu0 0.0
    %143 = vmatprep.subr.mxu0 0.0
    %144 = vmatpush1.msra.mxu0 0.0
    %145 = vmatprep.subr.mxu0 0.0
    %146 = vmatpush1.msra.mxu0 0.0
    %147 = vmatprep.subr.mxu0 0.0
    %148 = vmatpush1.msra.mxu0 0.0
    %149 = vmatprep.subr.mxu0 0.0
    %150 = vmatpush1.msra.mxu0 %v117
    %151 = vmatprep.subr.mxu0 0.0
    %152 = vmatpush2.msra.mxu0 0.0
    %153 = vmatprep.subr.mxu0 0.0
    %154 = vmatpush2.msra.mxu0 0.0
    %155 = vmatprep.subr.mxu0 0.0
    %156 = vmatpush2.msra.mxu0 0.0
    %157 = vmatprep.subr.mxu0 0.0
    %158 = vmatpush2.msra.mxu0 0.0
    %159 = vmatprep.subr.mxu0 0.0
    %160 = vmatpush2.msra.mxu0 0.0
    %161 = vmatprep.subr.mxu0 0.0
    %162 = vmatpush2.msra.mxu0 0.0
    %163 = vmatprep.subr.mxu0 0.0
    %164 = vmatpush2.msra.mxu0 0.0
    %165 = vmatprep.subr.mxu0 0.0
    %166 = vmatpush2.msra.mxu0 0.0
    %167 = vmatprep.subr.mxu0 0.0
    %168 = vmatpush2.msra.mxu0 0.0
    %169 = vmatprep.subr.mxu0 0.0
    %170 = vmatpush2.msra.mxu0 0.0
    %171 = vmatprep.subr.mxu0 0.0
    %172 = vmatpush2.msra.mxu0 0.0
    %173 = vmatprep.subr.mxu0 0.0
    %174 = vmatpush2.msra.mxu0 0.0
    %175 = vmatprep.subr.mxu0 0.0
    %176 = vmatpush2.msra.mxu0 0.0
    %177 = vmatprep.subr.mxu0 0.0
    %178 = vmatpush2.msra.mxu0 0.0
    %179 = vmatprep.subr.mxu0 0.0
    %180 = vmatpush2.msra.mxu0 0.0
    %181 = vmatprep.subr.mxu0 0.0
    %182 = vmatpush2.msra.mxu0 0.0
    %183 = vmatprep.mubr.f32.mxu0 0.0
    %184 = vmatmul.mubr.f32.gmra.mxu0 %v113
    %v185 = vpop.f32.mrf.mxu0
    %v186 = vadd.f32 %v108, %v185
    %v187 = vpop.f32.mrf.mxu0
    %188 = vdwg.mxu0
    %v189 = vld [vmem:[#allocation2 + $0x10] sm:$0x1]
    %v190 = vlaneseq
    %v191 = vshrl.u32 %v190, 7
    %v192 = vsub.s32 0, %v191
    %v193 = vrot.slane %v189, %v192
    %v194 = vadd.f32 %v186, %v193
    %v195 = vmax.f32 %v194, 0.0
    %v196 = vld [vmem:[#allocation2 + $0x18] sm:$0xff]
    %v197 = vld [vmem:[#allocation2 + $0x20] sm:$0xff]
    %v198 = vld [vmem:[#allocation2 + $0x28] sm:$0xff]
    %v199 = vld [vmem:[#allocation2 + $0x30] sm:$0xff]
    %v200 = vld [vmem:[#allocation2 + $0x38] sm:$0xff]
    %v201 = vld [vmem:[#allocation2 + $0x40] sm:$0xff]
    %v202 = vld [vmem:[#allocation2 + $0x48] sm:$0xff]
    %v203 = vld [vmem:[#allocation2 + $0x50] sm:$0xff]
    %v204 = vld [vmem:[#allocation2 + $0x58] sm:$0xff]
    %v205 = vld [vmem:[#allocation2 + $0x60] sm:$0xff]
    %v206 = vld [vmem:[#allocation2 + $0x68] sm:$0xff]
    %v207 = vld [vmem:[#allocation2 + $0x70] sm:$0xff]
    %v208 = vld [vmem:[#allocation2 + $0x78] sm:$0xff]
    %v209 = vld [vmem:[#allocation2 + $0x80] sm:$0xff]
    %v210 = vld [vmem:[#allocation2 + $0x88] sm:$0xff]
    %v211 = vld [vmem:[#allocation2 + $0x90] sm:$0xff]
    %v212 = vld [vmem:[#allocation2 + $0x98] sm:$0x1]
    %v213 = vlaneseq
    %v214 = vshrl.u32 %v213, 7
    %v215 = vsub.s32 0, %v214
    %v216 = vrot.slane %v212, %v215
    %217 = vmatprep.subr.mxu0 0.0
    %218 = vmatpush1.msra.mxu0 %v211
    %219 = vmatprep.subr.mxu0 0.0
    %220 = vmatpush1.msra.mxu0 %v210
    %221 = vmatprep.subr.mxu0 0.0
    %222 = vmatpush1.msra.mxu0 %v209
    %223 = vmatprep.subr.mxu0 0.0
    %224 = vmatpush1.msra.mxu0 %v208
    %225 = vmatprep.subr.mxu0 0.0
    %226 = vmatpush1.msra.mxu0 %v207
    %227 = vmatprep.subr.mxu0 0.0
    %228 = vmatpush1.msra.mxu0 %v206
    %229 = vmatprep.subr.mxu0 0.0
    %230 = vmatpush1.msra.mxu0 %v205
    %231 = vmatprep.subr.mxu0 0.0
    %232 = vmatpush1.msra.mxu0 %v204
    %233 = vmatprep.subr.mxu0 0.0
    %234 = vmatpush1.msra.mxu0 %v203
    %235 = vmatprep.subr.mxu0 0.0
    %236 = vmatpush1.msra.mxu0 %v202
    %237 = vmatprep.subr.mxu0 0.0
    %238 = vmatpush1.msra.mxu0 %v201
    %239 = vmatprep.subr.mxu0 0.0
    %240 = vmatpush1.msra.mxu0 %v200
    %241 = vmatprep.subr.mxu0 0.0
    %242 = vmatpush1.msra.mxu0 %v199
    %243 = vmatprep.subr.mxu0 0.0
    %244 = vmatpush1.msra.mxu0 %v198
    %245 = vmatprep.subr.mxu0 0.0
    %246 = vmatpush1.msra.mxu0 %v197
    %247 = vmatprep.subr.mxu0 0.0
    %248 = vmatpush1.msra.mxu0 %v196
    %249 = vmatprep.subr.mxu0 0.0
    %250 = vmatpush2.msra.mxu0 0.0
    %251 = vmatprep.subr.mxu0 0.0
    %252 = vmatpush2.msra.mxu0 0.0
    %253 = vmatprep.subr.mxu0 0.0
    %254 = vmatpush2.msra.mxu0 0.0
    %255 = vmatprep.subr.mxu0 0.0
    %256 = vmatpush2.msra.mxu0 0.0
    %257 = vmatprep.subr.mxu0 0.0
    %258 = vmatpush2.msra.mxu0 0.0
    %259 = vmatprep.subr.mxu0 0.0
    %260 = vmatpush2.msra.mxu0 0.0
    %261 = vmatprep.subr.mxu0 0.0
    %262 = vmatpush2.msra.mxu0 0.0
    %263 = vmatprep.subr.mxu0 0.0
    %264 = vmatpush2.msra.mxu0 0.0
    %265 = vmatprep.subr.mxu0 0.0
    %266 = vmatpush2.msra.mxu0 0.0
    %267 = vmatprep.subr.mxu0 0.0
    %268 = vmatpush2.msra.mxu0 0.0
    %269 = vmatprep.subr.mxu0 0.0
    %270 = vmatpush2.msra.mxu0 0.0
    %271 = vmatprep.subr.mxu0 0.0
    %272 = vmatpush2.msra.mxu0 0.0
    %273 = vmatprep.subr.mxu0 0.0
    %274 = vmatpush2.msra.mxu0 0.0
    %275 = vmatprep.subr.mxu0 0.0
    %276 = vmatpush2.msra.mxu0 0.0
    %277 = vmatprep.subr.mxu0 0.0
    %278 = vmatpush2.msra.mxu0 0.0
    %279 = vmatprep.subr.mxu0 0.0
    %280 = vmatpush2.msra.mxu0 0.0
    %281 = vmatprep.mubr.f32.mxu0 0.0
    %282 = vmatmul.mubr.f32.gmra.mxu0 %v195
    %v283 = vpop.f32.mrf.mxu0
    %v284 = vadd.f32 %v216, %v283
    %v285 = vpop.f32.mrf.mxu0
    %286 = vdwg.mxu0
    %v287 = vmax.f32 %v284, 0.0
    %v288 = vld [vmem:[#allocation2 + $0xa0] sm:$0x1]
    %v289 = vld [vmem:[#allocation2 + $0xa8] sm:$0x1]
    %291 = vset.pattern.permute.xlu0 0
    %292 = vperm.xlu0 %291, %v289
    %v293 = vpop.permute.xlu0 %292
    %295 = vmatprep.subr.mxu0 0.0
    %296 = vmatpush1.xpose.msra.mxu0 0.0
    %297 = vmatprep.subr.mxu0 0.0
    %298 = vmatpush1.xpose.msra.mxu0 0.0
    %299 = vmatprep.subr.mxu0 0.0
    %300 = vmatpush1.xpose.msra.mxu0 0.0
    %301 = vmatprep.subr.mxu0 0.0
    %302 = vmatpush1.xpose.msra.mxu0 0.0
    %303 = vmatprep.subr.mxu0 0.0
    %304 = vmatpush1.xpose.msra.mxu0 0.0
    %305 = vmatprep.subr.mxu0 0.0
    %306 = vmatpush1.xpose.msra.mxu0 0.0
    %307 = vmatprep.subr.mxu0 0.0
    %308 = vmatpush1.xpose.msra.mxu0 0.0
    %309 = vmatprep.subr.mxu0 0.0
    %310 = vmatpush1.xpose.msra.mxu0 0.0
    %311 = vmatprep.subr.mxu0 0.0
    %312 = vmatpush1.xpose.msra.mxu0 0.0
    %313 = vmatprep.subr.mxu0 0.0
    %314 = vmatpush1.xpose.msra.mxu0 0.0
    %315 = vmatprep.subr.mxu0 0.0
    %316 = vmatpush1.xpose.msra.mxu0 0.0
    %317 = vmatprep.subr.mxu0 0.0
    %318 = vmatpush1.xpose.msra.mxu0 0.0
    %319 = vmatprep.subr.mxu0 0.0
    %320 = vmatpush1.xpose.msra.mxu0 0.0
    %321 = vmatprep.subr.mxu0 0.0
    %322 = vmatpush1.xpose.msra.mxu0 0.0
    %323 = vmatprep.subr.mxu0 0.0
    %324 = vmatpush1.xpose.msra.mxu0 0.0
    %325 = vmatprep.subr.mxu0 0.0
    %326 = vmatpush1.xpose.msra.mxu0 %v287
    %327 = vmatprep.subr.mxu0 0.0
    %328 = vmatpush2.xpose.msra.mxu0 0.0
    %329 = vmatprep.subr.mxu0 0.0
    %330 = vmatpush2.xpose.msra.mxu0 0.0
    %331 = vmatprep.subr.mxu0 0.0
    %332 = vmatpush2.xpose.msra.mxu0 0.0
    %333 = vmatprep.subr.mxu0 0.0
    %334 = vmatpush2.xpose.msra.mxu0 0.0
    %335 = vmatprep.subr.mxu0 0.0
    %336 = vmatpush2.xpose.msra.mxu0 0.0
    %337 = vmatprep.subr.mxu0 0.0
    %338 = vmatpush2.xpose.msra.mxu0 0.0
    %339 = vmatprep.subr.mxu0 0.0
    %340 = vmatpush2.xpose.msra.mxu0 0.0
    %341 = vmatprep.subr.mxu0 0.0
    %342 = vmatpush2.xpose.msra.mxu0 0.0
    %343 = vmatprep.subr.mxu0 0.0
    %344 = vmatpush2.xpose.msra.mxu0 0.0
    %345 = vmatprep.subr.mxu0 0.0
    %346 = vmatpush2.xpose.msra.mxu0 0.0
    %347 = vmatprep.subr.mxu0 0.0
    %348 = vmatpush2.xpose.msra.mxu0 0.0
    %349 = vmatprep.subr.mxu0 0.0
    %350 = vmatpush2.xpose.msra.mxu0 0.0
    %351 = vmatprep.subr.mxu0 0.0
    %352 = vmatpush2.xpose.msra.mxu0 0.0
    %353 = vmatprep.subr.mxu0 0.0
    %354 = vmatpush2.xpose.msra.mxu0 0.0
    %355 = vmatprep.subr.mxu0 0.0
    %356 = vmatpush2.xpose.msra.mxu0 0.0
    %357 = vmatprep.subr.mxu0 0.0
    %358 = vmatpush2.xpose.msra.mxu0 0.0
    %359 = vmatprep.mubr.f32.mxu0 0.0
    %360 = vmatmul.mubr.f32.gmra.mxu0 %v288
    %v361 = vpop.f32.mrf.mxu0
    %v362 = vadd.f32 %v293, %v361
    %v363 = vpop.f32.mrf.mxu0
    %364 = vdwg.mxu0
    %vm365 = vcmask 57344
    %366 = vst.msk [vmem:[#allocation5] sm:$0x1] %vm365, %v362
    // Predicated region
    $region18: #{tpu_custom_call.1} parent=1 // pred_check
      _
    $region19: #{tpu_custom_call.1} parent=1 // pred_check_branch
      %368 = sbr.rel (0) target = $region21
    $region20: #{tpu_custom_call.1} parent=1 // pred_region
      %s370 = ssub.s32 16, 16
      %371 = vsyncadd [#allocation4], %s370
      %s373 = sshll.u32 [#allocation5], 4
      %s374 = int_to_ptr.vmem [resolvable:$true] %s373
      %376 = dma.vmem_to_hbm [thread:$0]  %s374, 16, %s3, [#allocation4]
    $region21: #{tpu_custom_call.1} parent=1 // pred_fallthru
      _
    // Predicated region
    $region22: #{tpu_custom_call.1} parent=1 // pred_check
      _
    $region23: #{tpu_custom_call.1} parent=1 // pred_check_branch
      %378 = sbr.rel (0) target = $region25
    $region24: #{tpu_custom_call.1} parent=1 // pred_region
      %379 = dma.done [#allocation4], 16
    $region25: #{tpu_custom_call.1} parent=1 // pred_fallthru
      _
    %380 = vsyncpa [#allocation3], 1
    %381 = vsyncpa [#allocation4], 1

</llo_original>
